<compile_context>
chip_gen: v7x
topology: tpu7x:2x2x1
jax: 0.10.0
libtpu: 0.0.40
codegen_flags: <defaults>
</compile_context>

<pallas_src>
import functools

import jax
import jax.numpy as jnp
from jax.experimental import pallas as pl
from jax.experimental.pallas import tpu as pltpu

INPUT_DIM = 300 * 3          # 900
EMBED_DIM = 64
HIDDEN_DIM = EMBED_DIM * 4   # 256
NUM_CLASSES = 5
PADDED_CLASSES = 128         # lane-dense output width (multiple of 128)
DEFAULT_TILE_B = 1024        # ~85% of HBM roofline needs >=512-1024 row tiles


def _round_up(n, m):
    return ((n + m - 1) // m) * m


def _mlp_kernel(x_ref, we_ref, be_ref, w1_ref, b1_ref, wt_ref, bt_ref, out_ref):
    """One batch tile: embedding -> hidden+ReLU -> folded (Linear(256,64)@head)."""
    # x streamed as f32; cast to bf16 here (VPU has huge slack, saves HBM bytes
    # vs. materializing a bf16 copy in the wrapper).
    x = x_ref[...].astype(jnp.bfloat16)                           # (TB, 900)

    # embedding: Linear(900, 64) -- bf16 MXU matmul, f32 accumulate, f32 bias.
    h = jnp.dot(x, we_ref[...], preferred_element_type=jnp.float32) + be_ref[...]

    # mlp first layer: Linear(64, 256) + ReLU (bias/ReLU in f32).
    h1 = jnp.dot(h.astype(w1_ref.dtype), w1_ref[...],
                 preferred_element_type=jnp.float32) + b1_ref[...]
    h1 = jnp.maximum(h1, 0.0)

    # Folded tail: Linear(256, 64) then Linear(64, 5) with no activation in
    # between collapses to a single (256, 128-padded) matmul.
    out = jnp.dot(h1.astype(wt_ref.dtype), wt_ref[...],
                  preferred_element_type=jnp.float32) + bt_ref[...]
    out_ref[...] = out.astype(out_ref.dtype)                      # bf16 store


def prepare_params(params):
    """One-time weight prep (hoisted out of the per-call hot path).

    Folds the activation-free tail and casts matmul weights to bf16; biases
    stay f32. Output columns are padded to 128 for lane-dense stores.
    """
    w2 = params["w2"].astype(jnp.float32)
    wh = params["wh"].astype(jnp.float32)
    w_tail = w2 @ wh                                               # (256, nc)
    b_tail = params["b2"].astype(jnp.float32) @ wh + params["bh"].astype(jnp.float32)
    nc = params["wh"].shape[1]
    w_tail = jnp.pad(w_tail, ((0, 0), (0, PADDED_CLASSES - nc)))
    b_tail = jnp.pad(b_tail, ((0, 0), (0, PADDED_CLASSES - nc)))
    return {
        "we": params["we"].astype(jnp.bfloat16),
        "be": params["be"].astype(jnp.float32),
        "w1": params["w1"].astype(jnp.bfloat16),
        "b1": params["b1"].astype(jnp.float32),
        "wt": w_tail.astype(jnp.bfloat16),
        "bt": b_tail.astype(jnp.float32),
    }


@functools.partial(jax.jit, static_argnames=("num_classes", "tile_b"))
def imu_mlp_forward(x, prepared, *, num_classes=NUM_CLASSES, tile_b=DEFAULT_TILE_B):
    """x: (B, seq, ch) float32. prepared: output of prepare_params()."""
    B = x.shape[0]
    x_flat = x.reshape(B, -1)                 # contiguous reshape; stays f32
    k_in = x_flat.shape[1]
    x_bytes = x_flat.dtype.itemsize

    # Tile selection: equalized tiles (padding waste < 8 rows per tile); force
    # an even number of grid steps once B spans >1 tile so v7x megacore splits
    # the "parallel" batch axis across both TensorCores.
    n_tiles = max(-(-B // tile_b), 1)
    if n_tiles > 1 and n_tiles % 2 == 1:
        n_tiles += 1
    tb = _round_up(-(-B // n_tiles), 8)
    b_pad = n_tiles * tb
    if b_pad != B:
        x_flat = jnp.pad(x_flat, ((0, b_pad - B), (0, 0)))

    we, be = prepared["we"], prepared["be"]
    w1, b1 = prepared["w1"], prepared["b1"]
    wt, bt = prepared["wt"], prepared["bt"]

    flops = 2 * b_pad * (k_in * EMBED_DIM
                         + EMBED_DIM * HIDDEN_DIM
                         + HIDDEN_DIM * PADDED_CLASSES)
    bytes_accessed = (b_pad * k_in * x_bytes                    # x stream (f32)
                      + b_pad * PADDED_CLASSES * 2              # bf16 output
                      + (k_in * EMBED_DIM + EMBED_DIM * HIDDEN_DIM
                         + HIDDEN_DIM * PADDED_CLASSES) * 2     # bf16 weights
                      + (EMBED_DIM + HIDDEN_DIM + PADDED_CLASSES) * 4)  # biases

    # VMEM footprint (double-buffered x/out tiles + resident weights, with lane
    # padding). Raise the scoped limit only when the v5e/v6e defaults would be
    # exceeded (e.g. tile_b=2048 with f32 x), capped well below v7x's 64 MiB.
    lane_k = _round_up(k_in, 128)
    vmem_needed = (2 * tb * lane_k * x_bytes
                   + 2 * tb * PADDED_CLASSES * 2
                   + 2 * (lane_k * EMBED_DIM + EMBED_DIM * HIDDEN_DIM
                          + HIDDEN_DIM * PADDED_CLASSES) * 2
                   + (1 << 20))
    vmem_limit = None
    if vmem_needed > (14 << 20):
        vmem_limit = min(int(vmem_needed) + (4 << 20), 48 << 20)

    const2d = lambda a: pl.BlockSpec(a.shape, lambda i: (0, 0))  # VMEM-resident

    out_padded = pl.pallas_call(
        _mlp_kernel,
        out_shape=jax.ShapeDtypeStruct((b_pad, PADDED_CLASSES), jnp.bfloat16),
        grid=(n_tiles,),
        in_specs=[
            pl.BlockSpec((tb, k_in), lambda i: (i, 0)),     # x: streamed per tile
            const2d(we), const2d(be),
            const2d(w1), const2d(b1),
            const2d(wt), const2d(bt),
        ],
        out_specs=pl.BlockSpec((tb, PADDED_CLASSES), lambda i: (i, 0)),
        compiler_params=pltpu.CompilerParams(
            dimension_semantics=("parallel",),
            vmem_limit_bytes=vmem_limit),
        cost_estimate=pl.CostEstimate(flops=flops, transcendentals=0,
                                      bytes_accessed=int(bytes_accessed)),
    )(x_flat, we, be, w1, b1, wt, bt)

    # Padded rows/cols (bias-valued / zero) are dropped here; upcast to f32.
    return out_padded[:B, :num_classes].astype(jnp.float32)


def init_params(key, input_dim=INPUT_DIM, embed_dim=EMBED_DIM,
                num_classes=NUM_CLASSES):
    """Deterministic init mimicking nn.Linear default (U[-1/sqrt(fan_in), +])."""
    hidden_dim = embed_dim * 4
    ks = jax.random.split(key, 8)

    def linear(kw, kb, fan_in, fan_out):
        bound = 1.0 / jnp.sqrt(jnp.float32(fan_in))
        w = jax.random.uniform(kw, (fan_in, fan_out), jnp.float32, -bound, bound)
        b = jax.random.uniform(kb, (1, fan_out), jnp.float32, -bound, bound)
        return w, b

    we, be = linear(ks[0], ks[1], input_dim, embed_dim)
    w1, b1 = linear(ks[2], ks[3], embed_dim, hidden_dim)
    w2, b2 = linear(ks[4], ks[5], hidden_dim, embed_dim)
    wh, bh = linear(ks[6], ks[7], embed_dim, num_classes)
    return {"we": we, "be": be, "w1": w1, "b1": b1,
            "w2": w2, "b2": b2, "wh": wh, "bh": bh}


def reference_forward_f32(x, params):
    """Plain-JAX f32 reference (original unfused math)."""
    B = x.shape[0]
    h = x.reshape(B, -1) @ params["we"] + params["be"]
    h = jnp.maximum(h @ params["w1"] + params["b1"], 0.0)
    h = h @ params["w2"] + params["b2"]
    return h @ params["wh"] + params["bh"]


def reference_forward_matched(x, params):
    """Same math path as the kernel (bf16 casts, f32 accum, folded tail, bf16 out)."""
    B = x.shape[0]
    xb = x.reshape(B, -1).astype(jnp.bfloat16)
    we = params["we"].astype(jnp.bfloat16)
    w1 = params["w1"].astype(jnp.bfloat16)
    w_tail = (params["w2"].astype(jnp.float32)
              @ params["wh"].astype(jnp.float32)).astype(jnp.bfloat16)
    b_tail = params["b2"] @ params["wh"] + params["bh"]
    h = jnp.dot(xb, we, preferred_element_type=jnp.float32) + params["be"]
    h1 = jnp.maximum(jnp.dot(h.astype(jnp.bfloat16), w1,
                             preferred_element_type=jnp.float32) + params["b1"], 0.0)
    out = jnp.dot(h1.astype(jnp.bfloat16), w_tail,
                  preferred_element_type=jnp.float32) + b_tail
    return out.astype(jnp.bfloat16).astype(jnp.float32)   # kernel stores bf16 logits


if __name__ == "__main__":
    key = jax.random.PRNGKey(0)
    k_x, k_p = jax.random.split(key)

    B, SEQ, CH = 2, 300, 3          # matches default input_dim = 300 * 3
    x = jax.random.normal(k_x, (B, SEQ, CH), dtype=jnp.float32)
    params = init_params(k_p, input_dim=SEQ * CH, embed_dim=EMBED_DIM,
                         num_classes=NUM_CLASSES)
    prepared = prepare_params(params)   # one-time weight prep, outside hot path

    out = jax.block_until_ready(imu_mlp_forward(x, prepared))
    assert out.shape == (B, NUM_CLASSES), out.shape

    ref_matched = jax.block_until_ready(reference_forward_matched(x, params))
    ref_f32 = jax.block_until_ready(reference_forward_f32(x, params))
    assert jnp.allclose(out, ref_matched, atol=1e-2, rtol=1e-2), \
        "mismatch vs matched bf16 reference"
    assert jnp.allclose(out, ref_f32, atol=7e-2, rtol=7e-2), \
        "mismatch vs f32 reference (beyond bf16 tolerance)"

    print("KERNEL_OK")
</pallas_src>

<mosaic_0001>
module attributes {stable_mosaic.version = 11 : i64} {
  func.func @_mlp_kernel(%arg0: i32, %arg1: memref<8x900xf32, #tpu.memory_space<vmem>>, %arg2: memref<900x64xbf16, #tpu.memory_space<vmem>>, %arg3: memref<1x64xf32, #tpu.memory_space<vmem>>, %arg4: memref<64x256xbf16, #tpu.memory_space<vmem>>, %arg5: memref<1x256xf32, #tpu.memory_space<vmem>>, %arg6: memref<256x128xbf16, #tpu.memory_space<vmem>>, %arg7: memref<1x128xf32, #tpu.memory_space<vmem>>, %arg8: memref<8x128xbf16, #tpu.memory_space<vmem>>) attributes {dimension_semantics = [#tpu.dimension_semantics<parallel>], iteration_bounds = array<i64: 1>, scalar_prefetch = 0 : i64, scratch_operands = 0 : i64, tpu.core_type = #tpu.core_type<tc>, window_params = [{transform_indices = @transform_0, window_bounds = array<i64: 8, 900>}, {pipeline_mode = #tpu.pipeline_mode<synchronous>, transform_indices = @transform_1, window_bounds = array<i64: 900, 64>}, {pipeline_mode = #tpu.pipeline_mode<synchronous>, transform_indices = @transform_2, window_bounds = array<i64: 1, 64>}, {pipeline_mode = #tpu.pipeline_mode<synchronous>, transform_indices = @transform_3, window_bounds = array<i64: 64, 256>}, {pipeline_mode = #tpu.pipeline_mode<synchronous>, transform_indices = @transform_4, window_bounds = array<i64: 1, 256>}, {pipeline_mode = #tpu.pipeline_mode<synchronous>, transform_indices = @transform_5, window_bounds = array<i64: 256, 128>}, {pipeline_mode = #tpu.pipeline_mode<synchronous>, transform_indices = @transform_6, window_bounds = array<i64: 1, 128>}, {transform_indices = @transform_7, window_bounds = array<i64: 8, 128>}]} {
    %c0 = arith.constant 0 : index
    %c0_0 = arith.constant 0 : index
    %0 = vector.load %arg1[%c0, %c0_0] : memref<8x900xf32, #tpu.memory_space<vmem>>, vector<8x900xf32>
    %1 = arith.truncf %0 : vector<8x900xf32> to vector<8x900xbf16>
    %c0_1 = arith.constant 0 : index
    %c0_2 = arith.constant 0 : index
    %2 = vector.load %arg2[%c0_1, %c0_2] : memref<900x64xbf16, #tpu.memory_space<vmem>>, vector<900x64xbf16>
    %cst = arith.constant dense<0.000000e+00> : vector<8x64xf32>
    %3 = tpu.matmul %1, %2, %cst {dimension_numbers = #tpu.dot_dimension_numbers<[1], [0], [0], [1], [0, 0, 1, 1], [], []>} : vector<8x900xbf16>, vector<900x64xbf16>, vector<8x64xf32> -> vector<8x64xf32>
    %c0_3 = arith.constant 0 : index
    %c0_4 = arith.constant 0 : index
    %4 = vector.load %arg3[%c0_3, %c0_4] : memref<1x64xf32, #tpu.memory_space<vmem>>, vector<1x64xf32>
    %5 = vector.broadcast %4 : vector<1x64xf32> to vector<8x64xf32>
    %6 = arith.addf %3, %5 : vector<8x64xf32>
    %7 = arith.truncf %6 : vector<8x64xf32> to vector<8x64xbf16>
    %c0_5 = arith.constant 0 : index
    %c0_6 = arith.constant 0 : index
    %8 = vector.load %arg4[%c0_5, %c0_6] : memref<64x256xbf16, #tpu.memory_space<vmem>>, vector<64x256xbf16>
    %cst_7 = arith.constant dense<0.000000e+00> : vector<8x256xf32>
    %9 = tpu.matmul %7, %8, %cst_7 {dimension_numbers = #tpu.dot_dimension_numbers<[1], [0], [0], [1], [0, 0, 1, 1], [], []>} : vector<8x64xbf16>, vector<64x256xbf16>, vector<8x256xf32> -> vector<8x256xf32>
    %c0_8 = arith.constant 0 : index
    %c0_9 = arith.constant 0 : index
    %10 = vector.load %arg5[%c0_8, %c0_9] : memref<1x256xf32, #tpu.memory_space<vmem>>, vector<1x256xf32>
    %11 = vector.broadcast %10 : vector<1x256xf32> to vector<8x256xf32>
    %12 = arith.addf %9, %11 : vector<8x256xf32>
    %cst_10 = arith.constant 0.000000e+00 : f32
    %13 = vector.broadcast %cst_10 : f32 to vector<8x256xf32>
    %14 = arith.maximumf %12, %13 : vector<8x256xf32>
    %15 = arith.truncf %14 : vector<8x256xf32> to vector<8x256xbf16>
    %c0_11 = arith.constant 0 : index
    %c0_12 = arith.constant 0 : index
    %16 = vector.load %arg6[%c0_11, %c0_12] : memref<256x128xbf16, #tpu.memory_space<vmem>>, vector<256x128xbf16>
    %cst_13 = arith.constant dense<0.000000e+00> : vector<8x128xf32>
    %17 = tpu.matmul %15, %16, %cst_13 {dimension_numbers = #tpu.dot_dimension_numbers<[1], [0], [0], [1], [0, 0, 1, 1], [], []>} : vector<8x256xbf16>, vector<256x128xbf16>, vector<8x128xf32> -> vector<8x128xf32>
    %c0_14 = arith.constant 0 : index
    %c0_15 = arith.constant 0 : index
    %18 = vector.load %arg7[%c0_14, %c0_15] : memref<1x128xf32, #tpu.memory_space<vmem>>, vector<1x128xf32>
    %19 = vector.broadcast %18 : vector<1x128xf32> to vector<8x128xf32>
    %20 = arith.addf %17, %19 : vector<8x128xf32>
    %21 = arith.truncf %20 : vector<8x128xf32> to vector<8x128xbf16>
    %c0_16 = arith.constant 0 : index
    %c0_17 = arith.constant 0 : index
    %22 = vector.load %arg8[%c0_16, %c0_17] : memref<8x128xbf16, #tpu.memory_space<vmem>>, vector<8x128xbf16>
    tpu.vector_store %arg8[%c0_16, %c0_17], %21 {strides = array<i32>} : memref<8x128xbf16, #tpu.memory_space<vmem>>, vector<8x128xbf16>,
    return
  }
  func.func @transform_0(%arg0: i32) -> (i32, i32) {
    %c0_i32 = arith.constant 0 : i32
    %c0_i32_0 = arith.constant 0 : i32
    return %arg0, %c0_i32 : i32, i32
  }
  func.func @transform_1(%arg0: i32) -> (i32, i32) {
    %c0_i32 = arith.constant 0 : i32
    %c0_i32_0 = arith.constant 0 : i32
    %c0_i32_1 = arith.constant 0 : i32
    return %c0_i32, %c0_i32_0 : i32, i32
  }
  func.func @transform_2(%arg0: i32) -> (i32, i32) {
    %c0_i32 = arith.constant 0 : i32
    %c0_i32_0 = arith.constant 0 : i32
    %c0_i32_1 = arith.constant 0 : i32
    return %c0_i32, %c0_i32_0 : i32, i32
  }
  func.func @transform_3(%arg0: i32) -> (i32, i32) {
    %c0_i32 = arith.constant 0 : i32
    %c0_i32_0 = arith.constant 0 : i32
    %c0_i32_1 = arith.constant 0 : i32
    return %c0_i32, %c0_i32_0 : i32, i32
  }
  func.func @transform_4(%arg0: i32) -> (i32, i32) {
    %c0_i32 = arith.constant 0 : i32
    %c0_i32_0 = arith.constant 0 : i32
    %c0_i32_1 = arith.constant 0 : i32
    return %c0_i32, %c0_i32_0 : i32, i32
  }
  func.func @transform_5(%arg0: i32) -> (i32, i32) {
    %c0_i32 = arith.constant 0 : i32
    %c0_i32_0 = arith.constant 0 : i32
    %c0_i32_1 = arith.constant 0 : i32
    return %c0_i32, %c0_i32_0 : i32, i32
  }
  func.func @transform_6(%arg0: i32) -> (i32, i32) {
    %c0_i32 = arith.constant 0 : i32
    %c0_i32_0 = arith.constant 0 : i32
    %c0_i32_1 = arith.constant 0 : i32
    return %c0_i32, %c0_i32_0 : i32, i32
  }
  func.func @transform_7(%arg0: i32) -> (i32, i32) {
    %c0_i32 = arith.constant 0 : i32
    %c0_i32_0 = arith.constant 0 : i32
    return %arg0, %c0_i32 : i32, i32
  }
}

</mosaic_0001>

<llo_original>
// kernel: imu_mlp_forward.1
$region0: #{imu_mlp_forward.1}
  #allocation0 [shape = 'u32[]', space=smem, size = 0x4, offset = 0x4, fixed_abs, tag = 'smem constant byte address 0x4 - core index']
  #allocation1 [shape = 'u32[144,128]{1,0:T(1,128)}', space=vmem, size = 0x12000, scoped, tag = 'internal scratch']
  %s0 = inlined_call_operand.vmem [shape: f32[8,900], index: 0, kind: input, shape index: {}]
  %s1 = inlined_call_operand.vmem [shape: bf16[900,64], index: 1, kind: input, shape index: {}]
  %s2 = inlined_call_operand.vmem [shape: f32[1,64], index: 2, kind: input, shape index: {}]
  %s3 = inlined_call_operand.vmem [shape: bf16[64,256], index: 3, kind: input, shape index: {}]
  %s4 = inlined_call_operand.vmem [shape: f32[1,256], index: 4, kind: input, shape index: {}]
  %s5 = inlined_call_operand.vmem [shape: bf16[256,128], index: 5, kind: input, shape index: {}]
  %s6 = inlined_call_operand.vmem [shape: f32[1,128], index: 6, kind: input, shape index: {}]
  %s7 = inlined_call_operand.vmem [shape: bf16[8,128], index: 7, kind: output, shape index: {}]
  %s8 = sld [smem:[#allocation0]]
  $region38: #{imu_mlp_forward.1} parent=0
    _
  %s10 = ssub.s32 1, %s8
  %s11 = scalar_select 0, %s10, %s8
  // Predicated region
  $region2: #{imu_mlp_forward.1} parent=0 // pred_check
    _
  $region3: #{imu_mlp_forward.1} parent=0 // pred_check_branch
    %13 = sbr.rel (0) target = $region5
  $region4: #{imu_mlp_forward.1} parent=0 // pred_region
    _
  $region5: #{imu_mlp_forward.1} parent=0 // pred_fallthru
    _
  // Predicated region
  $region6: #{imu_mlp_forward.1} parent=0 // pred_check
    _
  $region7: #{imu_mlp_forward.1} parent=0 // pred_check_branch
    %15 = sbr.rel (0) target = $region9
  $region8: #{imu_mlp_forward.1} parent=0 // pred_region
    _
  $region9: #{imu_mlp_forward.1} parent=0 // pred_fallthru
    _
  // Predicated region
  $region10: #{imu_mlp_forward.1} parent=0 // pred_check
    _
  $region11: #{imu_mlp_forward.1} parent=0 // pred_check_branch
    %17 = sbr.rel (0) target = $region13
  $region12: #{imu_mlp_forward.1} parent=0 // pred_region
    _
  $region13: #{imu_mlp_forward.1} parent=0 // pred_fallthru
    _
  // Predicated region
  $region14: #{imu_mlp_forward.1} parent=0 // pred_check
    _
  $region15: #{imu_mlp_forward.1} parent=0 // pred_check_branch
    %19 = sbr.rel (0) target = $region17
  $region16: #{imu_mlp_forward.1} parent=0 // pred_region
    _
  $region17: #{imu_mlp_forward.1} parent=0 // pred_fallthru
    _
  // Predicated region
  $region18: #{imu_mlp_forward.1} parent=0 // pred_check
    _
  $region19: #{imu_mlp_forward.1} parent=0 // pred_check_branch
    %21 = sbr.rel (0) target = $region21
  $region20: #{imu_mlp_forward.1} parent=0 // pred_region
    _
  $region21: #{imu_mlp_forward.1} parent=0 // pred_fallthru
    _
  // Predicated region
  $region22: #{imu_mlp_forward.1} parent=0 // pred_check
    _
  $region23: #{imu_mlp_forward.1} parent=0 // pred_check_branch
    %23 = sbr.rel (0) target = $region25
  $region24: #{imu_mlp_forward.1} parent=0 // pred_region
    _
  $region25: #{imu_mlp_forward.1} parent=0 // pred_fallthru
    _
  // Predicated region
  $region26: #{imu_mlp_forward.1} parent=0 // pred_check
    _
  $region27: #{imu_mlp_forward.1} parent=0 // pred_check_branch
    %25 = sbr.rel (0) target = $region29
  $region28: #{imu_mlp_forward.1} parent=0 // pred_region
    _
  $region29: #{imu_mlp_forward.1} parent=0 // pred_fallthru
    _
  %v27 = vld [vmem:[%s0] sm:$0xff]
  %v28 = vld [vmem:[%s0 + $0x8] sm:$0xff]
  %v29 = vld [vmem:[%s0 + $0x10] sm:$0xff]
  %v30 = vld [vmem:[%s0 + $0x18] sm:$0xff]
  %v31 = vld [vmem:[%s0 + $0x20] sm:$0xff]
  %v32 = vld [vmem:[%s0 + $0x28] sm:$0xff]
  %v33 = vld [vmem:[%s0 + $0x30] sm:$0xff]
  %v34 = vld [vmem:[%s0 + $0x38] sm:$0xff]
  %v35 = vpack.c.bf16 %v27, %v27
  %v36 = vpack.c.bf16 %v28, %v28
  %v37 = vpack.c.bf16 %v29, %v29
  %v38 = vpack.c.bf16 %v30, %v30
  %v39 = vpack.c.bf16 %v31, %v31
  %v40 = vpack.c.bf16 %v32, %v32
  %v41 = vpack.c.bf16 %v33, %v33
  %v42 = vpack.c.bf16 %v34, %v34
  %v43 = vld [vmem:[%s1] sm:$0xf]
  %v44 = vld [vmem:[%s1 + $0x4] sm:$0xf]
  %v45 = vld [vmem:[%s1 + $0x8] sm:$0xf]
  %v46 = vld [vmem:[%s1 + $0xc] sm:$0xf]
  %v47 = vld [vmem:[%s1 + $0x10] sm:$0xf]
  %v48 = vld [vmem:[%s1 + $0x14] sm:$0xf]
  %v49 = vld [vmem:[%s1 + $0x18] sm:$0xf]
  %v50 = vld [vmem:[%s1 + $0x1c] sm:$0xf]
  %v51 = vld [vmem:[%s1 + $0x20] sm:$0xf]
  %v52 = vld [vmem:[%s1 + $0x24] sm:$0xf]
  %v53 = vld [vmem:[%s1 + $0x28] sm:$0xf]
  %v54 = vld [vmem:[%s1 + $0x2c] sm:$0xf]
  %v55 = vld [vmem:[%s1 + $0x30] sm:$0xf]
  %v56 = vld [vmem:[%s1 + $0x34] sm:$0xf]
  %v57 = vld [vmem:[%s1 + $0x38] sm:$0xf]
  %v58 = vld [vmem:[%s1 + $0x3c] sm:$0xf]
  %v59 = vld [vmem:[%s1 + $0x40] sm:$0xf]
  %v60 = vld [vmem:[%s1 + $0x44] sm:$0xf]
  %v61 = vld [vmem:[%s1 + $0x48] sm:$0xf]
  %v62 = vld [vmem:[%s1 + $0x4c] sm:$0xf]
  %v63 = vld [vmem:[%s1 + $0x50] sm:$0xf]
  %v64 = vld [vmem:[%s1 + $0x54] sm:$0xf]
  %v65 = vld [vmem:[%s1 + $0x58] sm:$0xf]
  %v66 = vld [vmem:[%s1 + $0x5c] sm:$0xf]
  %v67 = vld [vmem:[%s1 + $0x60] sm:$0xf]
  %v68 = vld [vmem:[%s1 + $0x64] sm:$0xf]
  %v69 = vld [vmem:[%s1 + $0x68] sm:$0xf]
  %v70 = vld [vmem:[%s1 + $0x6c] sm:$0xf]
  %v71 = vld [vmem:[%s1 + $0x70] sm:$0xf]
  %v72 = vld [vmem:[%s1 + $0x74] sm:$0xf]
  %v73 = vld [vmem:[%s1 + $0x78] sm:$0xf]
  %v74 = vld [vmem:[%s1 + $0x7c] sm:$0xf]
  %v75 = vld [vmem:[%s1 + $0x80] sm:$0xf]
  %v76 = vld [vmem:[%s1 + $0x84] sm:$0xf]
  %v77 = vld [vmem:[%s1 + $0x88] sm:$0xf]
  %v78 = vld [vmem:[%s1 + $0x8c] sm:$0xf]
  %v79 = vld [vmem:[%s1 + $0x90] sm:$0xf]
  %v80 = vld [vmem:[%s1 + $0x94] sm:$0xf]
  %v81 = vld [vmem:[%s1 + $0x98] sm:$0xf]
  %v82 = vld [vmem:[%s1 + $0x9c] sm:$0xf]
  %v83 = vld [vmem:[%s1 + $0xa0] sm:$0xf]
  %v84 = vld [vmem:[%s1 + $0xa4] sm:$0xf]
  %v85 = vld [vmem:[%s1 + $0xa8] sm:$0xf]
  %v86 = vld [vmem:[%s1 + $0xac] sm:$0xf]
  %v87 = vld [vmem:[%s1 + $0xb0] sm:$0xf]
  %v88 = vld [vmem:[%s1 + $0xb4] sm:$0xf]
  %v89 = vld [vmem:[%s1 + $0xb8] sm:$0xf]
  %v90 = vld [vmem:[%s1 + $0xbc] sm:$0xf]
  %v91 = vld [vmem:[%s1 + $0xc0] sm:$0xf]
  %v92 = vld [vmem:[%s1 + $0xc4] sm:$0xf]
  %v93 = vld [vmem:[%s1 + $0xc8] sm:$0xf]
  %v94 = vld [vmem:[%s1 + $0xcc] sm:$0xf]
  %v95 = vld [vmem:[%s1 + $0xd0] sm:$0xf]
  %v96 = vld [vmem:[%s1 + $0xd4] sm:$0xf]
  %v97 = vld [vmem:[%s1 + $0xd8] sm:$0xf]
  %v98 = vld [vmem:[%s1 + $0xdc] sm:$0xf]
  %v99 = vld [vmem:[%s1 + $0xe0] sm:$0xf]
  %v100 = vld [vmem:[%s1 + $0xe4] sm:$0xf]
  %v101 = vld [vmem:[%s1 + $0xe8] sm:$0xf]
  %v102 = vld [vmem:[%s1 + $0xec] sm:$0xf]
  %v103 = vld [vmem:[%s1 + $0xf0] sm:$0xf]
  %v104 = vld [vmem:[%s1 + $0xf4] sm:$0xf]
  %v105 = vld [vmem:[%s1 + $0xf8] sm:$0xf]
  %v106 = vld [vmem:[%s1 + $0xfc] sm:$0xf]
  %v107 = vld [vmem:[%s1 + $0x100] sm:$0xf]
  %v108 = vld [vmem:[%s1 + $0x104] sm:$0xf]
  %v109 = vld [vmem:[%s1 + $0x108] sm:$0xf]
  %v110 = vld [vmem:[%s1 + $0x10c] sm:$0xf]
  %v111 = vld [vmem:[%s1 + $0x110] sm:$0xf]
  %v112 = vld [vmem:[%s1 + $0x114] sm:$0xf]
  %v113 = vld [vmem:[%s1 + $0x118] sm:$0xf]
  %v114 = vld [vmem:[%s1 + $0x11c] sm:$0xf]
  %v115 = vld [vmem:[%s1 + $0x120] sm:$0xf]
  %v116 = vld [vmem:[%s1 + $0x124] sm:$0xf]
  %v117 = vld [vmem:[%s1 + $0x128] sm:$0xf]
  %v118 = vld [vmem:[%s1 + $0x12c] sm:$0xf]
  %v119 = vld [vmem:[%s1 + $0x130] sm:$0xf]
  %v120 = vld [vmem:[%s1 + $0x134] sm:$0xf]
  %v121 = vld [vmem:[%s1 + $0x138] sm:$0xf]
  %v122 = vld [vmem:[%s1 + $0x13c] sm:$0xf]
  %v123 = vld [vmem:[%s1 + $0x140] sm:$0xf]
  %v124 = vld [vmem:[%s1 + $0x144] sm:$0xf]
  %v125 = vld [vmem:[%s1 + $0x148] sm:$0xf]
  %v126 = vld [vmem:[%s1 + $0x14c] sm:$0xf]
  %v127 = vld [vmem:[%s1 + $0x150] sm:$0xf]
  %v128 = vld [vmem:[%s1 + $0x154] sm:$0xf]
  %v129 = vld [vmem:[%s1 + $0x158] sm:$0xf]
  %v130 = vld [vmem:[%s1 + $0x15c] sm:$0xf]
  %v131 = vld [vmem:[%s1 + $0x160] sm:$0xf]
  %v132 = vld [vmem:[%s1 + $0x164] sm:$0xf]
  %v133 = vld [vmem:[%s1 + $0x168] sm:$0xf]
  %v134 = vld [vmem:[%s1 + $0x16c] sm:$0xf]
  %v135 = vld [vmem:[%s1 + $0x170] sm:$0xf]
  %v136 = vld [vmem:[%s1 + $0x174] sm:$0xf]
  %v137 = vld [vmem:[%s1 + $0x178] sm:$0xf]
  %v138 = vld [vmem:[%s1 + $0x17c] sm:$0xf]
  %v139 = vld [vmem:[%s1 + $0x180] sm:$0xf]
  %v140 = vld [vmem:[%s1 + $0x184] sm:$0xf]
  %v141 = vld [vmem:[%s1 + $0x188] sm:$0xf]
  %v142 = vld [vmem:[%s1 + $0x18c] sm:$0xf]
  %v143 = vld [vmem:[%s1 + $0x190] sm:$0xf]
  %v144 = vld [vmem:[%s1 + $0x194] sm:$0xf]
  %v145 = vld [vmem:[%s1 + $0x198] sm:$0xf]
  %v146 = vld [vmem:[%s1 + $0x19c] sm:$0xf]
  %v147 = vld [vmem:[%s1 + $0x1a0] sm:$0xf]
  %v148 = vld [vmem:[%s1 + $0x1a4] sm:$0xf]
  %v149 = vld [vmem:[%s1 + $0x1a8] sm:$0xf]
  %v150 = vld [vmem:[%s1 + $0x1ac] sm:$0xf]
  %v151 = vld [vmem:[%s1 + $0x1b0] sm:$0xf]
  %v152 = vld [vmem:[%s1 + $0x1b4] sm:$0xf]
  %v153 = vld [vmem:[%s1 + $0x1b8] sm:$0xf]
  %v154 = vld [vmem:[%s1 + $0x1bc] sm:$0xf]
  %v155 = vld [vmem:[%s1 + $0x1c0] sm:$0x3]
  %v156 = vld [vmem:[%s2] sm:$0x1]
  %v158 = vlaneseq
  %v159 = vshrl.u32 %v158, 7
  %v160 = vsub.s32 0, %v159
  %v161 = vrot.slane %v156, %v160
  %v276 = vunpack.c.l.b16 %v43
  %v277 = vunpack.c.l.b16 %v44
  %v278 = vunpack.c.l.b16 %v45
  %v279 = vunpack.c.l.b16 %v46
  %v280 = vunpack.c.l.b16 %v47
  %v281 = vunpack.c.l.b16 %v48
  %v282 = vunpack.c.l.b16 %v49
  %v283 = vunpack.c.l.b16 %v50
  %v284 = vunpack.c.l.b16 %v51
  %v285 = vunpack.c.l.b16 %v52
  %v286 = vunpack.c.l.b16 %v53
  %v287 = vunpack.c.l.b16 %v54
  %v288 = vunpack.c.l.b16 %v55
  %v289 = vunpack.c.l.b16 %v56
  %v290 = vunpack.c.l.b16 %v57
  %v291 = vunpack.c.l.b16 %v58
  %v292 = vunpack.c.l.b16 %v59
  %v293 = vunpack.c.l.b16 %v60
  %v294 = vunpack.c.l.b16 %v61
  %v295 = vunpack.c.l.b16 %v62
  %v296 = vunpack.c.l.b16 %v63
  %v297 = vunpack.c.l.b16 %v64
  %v298 = vunpack.c.l.b16 %v65
  %v299 = vunpack.c.l.b16 %v66
  %v300 = vunpack.c.l.b16 %v67
  %v301 = vunpack.c.l.b16 %v68
  %v302 = vunpack.c.l.b16 %v69
  %v303 = vunpack.c.l.b16 %v70
  %v304 = vunpack.c.l.b16 %v71
  %v305 = vunpack.c.l.b16 %v72
  %v306 = vunpack.c.l.b16 %v73
  %v307 = vunpack.c.l.b16 %v74
  %v308 = vunpack.c.l.b16 %v75
  %v309 = vunpack.c.l.b16 %v76
  %v310 = vunpack.c.l.b16 %v77
  %v311 = vunpack.c.l.b16 %v78
  %v312 = vunpack.c.l.b16 %v79
  %v313 = vunpack.c.l.b16 %v80
  %v314 = vunpack.c.l.b16 %v81
  %v315 = vunpack.c.l.b16 %v82
  %v316 = vunpack.c.l.b16 %v83
  %v317 = vunpack.c.l.b16 %v84
  %v318 = vunpack.c.l.b16 %v85
  %v319 = vunpack.c.l.b16 %v86
  %v320 = vunpack.c.l.b16 %v87
  %v321 = vunpack.c.l.b16 %v88
  %v322 = vunpack.c.l.b16 %v89
  %v323 = vunpack.c.l.b16 %v90
  %v324 = vunpack.c.l.b16 %v91
  %v325 = vunpack.c.l.b16 %v92
  %v326 = vunpack.c.l.b16 %v93
  %v327 = vunpack.c.l.b16 %v94
  %v328 = vunpack.c.l.b16 %v95
  %v329 = vunpack.c.l.b16 %v96
  %v330 = vunpack.c.l.b16 %v97
  %v331 = vunpack.c.l.b16 %v98
  %v332 = vunpack.c.l.b16 %v99
  %v333 = vunpack.c.l.b16 %v100
  %v334 = vunpack.c.l.b16 %v101
  %v335 = vunpack.c.l.b16 %v102
  %v336 = vunpack.c.l.b16 %v103
  %v337 = vunpack.c.l.b16 %v104
  %v338 = vunpack.c.l.b16 %v105
  %v339 = vunpack.c.l.b16 %v106
  %v340 = vunpack.c.l.b16 %v107
  %v341 = vunpack.c.l.b16 %v108
  %v342 = vunpack.c.l.b16 %v109
  %v343 = vunpack.c.l.b16 %v110
  %v344 = vunpack.c.l.b16 %v111
  %v345 = vunpack.c.l.b16 %v112
  %v346 = vunpack.c.l.b16 %v113
  %v347 = vunpack.c.l.b16 %v114
  %v348 = vunpack.c.l.b16 %v115
  %v349 = vunpack.c.l.b16 %v116
  %v350 = vunpack.c.l.b16 %v117
  %v351 = vunpack.c.l.b16 %v118
  %v352 = vunpack.c.l.b16 %v119
  %v353 = vunpack.c.l.b16 %v120
  %v354 = vunpack.c.l.b16 %v121
  %v355 = vunpack.c.l.b16 %v122
  %v356 = vunpack.c.l.b16 %v123
  %v357 = vunpack.c.l.b16 %v124
  %v358 = vunpack.c.l.b16 %v125
  %v359 = vunpack.c.l.b16 %v126
  %v360 = vunpack.c.l.b16 %v127
  %v361 = vunpack.c.l.b16 %v128
  %v362 = vunpack.c.l.b16 %v129
  %v363 = vunpack.c.l.b16 %v130
  %v364 = vunpack.c.l.b16 %v131
  %v365 = vunpack.c.l.b16 %v132
  %v366 = vunpack.c.l.b16 %v133
  %v367 = vunpack.c.l.b16 %v134
  %v368 = vunpack.c.l.b16 %v135
  %v369 = vunpack.c.l.b16 %v136
  %v370 = vunpack.c.l.b16 %v137
  %v371 = vunpack.c.l.b16 %v138
  %v372 = vunpack.c.l.b16 %v139
  %v373 = vunpack.c.l.b16 %v140
  %v374 = vunpack.c.l.b16 %v141
  %v375 = vunpack.c.l.b16 %v142
  %v376 = vunpack.c.l.b16 %v143
  %v377 = vunpack.c.l.b16 %v144
  %v378 = vunpack.c.l.b16 %v145
  %v379 = vunpack.c.l.b16 %v146
  %v380 = vunpack.c.l.b16 %v147
  %v381 = vunpack.c.l.b16 %v148
  %v382 = vunpack.c.l.b16 %v149
  %v383 = vunpack.c.l.b16 %v150
  %v384 = vunpack.c.l.b16 %v151
  %v385 = vunpack.c.l.b16 %v152
  %v386 = vunpack.c.l.b16 %v153
  %v387 = vunpack.c.l.b16 %v154
  %v388 = vunpack.c.l.b16 %v155
  %v389 = vpack.c.b16 %v277, %v276
  %v390 = vpack.c.b16 %v279, %v278
  %v391 = vpack.c.b16 %v281, %v280
  %v392 = vpack.c.b16 %v283, %v282
  %v393 = vpack.c.b16 %v285, %v284
  %v394 = vpack.c.b16 %v287, %v286
  %v395 = vpack.c.b16 %v289, %v288
  %v396 = vpack.c.b16 %v291, %v290
  %v397 = vpack.c.b16 %v293, %v292
  %v398 = vpack.c.b16 %v295, %v294
  %v399 = vpack.c.b16 %v297, %v296
  %v400 = vpack.c.b16 %v299, %v298
  %v401 = vpack.c.b16 %v301, %v300
  %v402 = vpack.c.b16 %v303, %v302
  %v403 = vpack.c.b16 %v305, %v304
  %v404 = vpack.c.b16 %v307, %v306
  %v405 = vpack.c.b16 %v309, %v308
  %v406 = vpack.c.b16 %v311, %v310
  %v407 = vpack.c.b16 %v313, %v312
  %v408 = vpack.c.b16 %v315, %v314
  %v409 = vpack.c.b16 %v317, %v316
  %v410 = vpack.c.b16 %v319, %v318
  %v411 = vpack.c.b16 %v321, %v320
  %v412 = vpack.c.b16 %v323, %v322
  %v413 = vpack.c.b16 %v325, %v324
  %v414 = vpack.c.b16 %v327, %v326
  %v415 = vpack.c.b16 %v329, %v328
  %v416 = vpack.c.b16 %v331, %v330
  %v417 = vpack.c.b16 %v333, %v332
  %v418 = vpack.c.b16 %v335, %v334
  %v419 = vpack.c.b16 %v337, %v336
  %v420 = vpack.c.b16 %v339, %v338
  %v421 = vpack.c.b16 %v341, %v340
  %v422 = vpack.c.b16 %v343, %v342
  %v423 = vpack.c.b16 %v345, %v344
  %v424 = vpack.c.b16 %v347, %v346
  %v425 = vpack.c.b16 %v349, %v348
  %v426 = vpack.c.b16 %v351, %v350
  %v427 = vpack.c.b16 %v353, %v352
  %v428 = vpack.c.b16 %v355, %v354
  %v429 = vpack.c.b16 %v357, %v356
  %v430 = vpack.c.b16 %v359, %v358
  %v431 = vpack.c.b16 %v361, %v360
  %v432 = vpack.c.b16 %v363, %v362
  %v433 = vpack.c.b16 %v365, %v364
  %v434 = vpack.c.b16 %v367, %v366
  %v435 = vpack.c.b16 %v369, %v368
  %v436 = vpack.c.b16 %v371, %v370
  %v437 = vpack.c.b16 %v373, %v372
  %v438 = vpack.c.b16 %v375, %v374
  %v439 = vpack.c.b16 %v377, %v376
  %v440 = vpack.c.b16 %v379, %v378
  %v441 = vpack.c.b16 %v381, %v380
  %v442 = vpack.c.b16 %v383, %v382
  %v443 = vpack.c.b16 %v385, %v384
  %v444 = vpack.c.b16 %v387, %v386
  %v445 = vpack.c.b16 %v388, %v388
  %vm502 = vcmask 31744
  %v504 = vsel %vm502, %v42, 0
  %vm506 = vcmask 1041408
  %v508 = vsel %vm506, %v445, 0
  %510 = vmatprep.subr.bf16.mxu0 0
  %511 = vmatpush1.bf16.msra.mxu0 %v389
  %512 = vmatprep.subr.bf16.mxu0 0
  %513 = vmatpush1.bf16.msra.mxu0 %v390
  %514 = vmatprep.subr.bf16.mxu0 0
  %515 = vmatpush1.bf16.msra.mxu0 %v391
  %516 = vmatprep.subr.bf16.mxu0 0
  %517 = vmatpush1.bf16.msra.mxu0 %v392
  %518 = vmatprep.subr.bf16.mxu0 0
  %519 = vmatpush1.bf16.msra.mxu0 %v393
  %520 = vmatprep.subr.bf16.mxu0 0
  %521 = vmatpush1.bf16.msra.mxu0 %v394
  %522 = vmatprep.subr.bf16.mxu0 0
  %523 = vmatpush1.bf16.msra.mxu0 %v395
  %524 = vmatprep.subr.bf16.mxu0 0
  %525 = vmatpush1.bf16.msra.mxu0 %v396
  %526 = vmatprep.subr.bf16.mxu0 0
  %527 = vmatpush1.bf16.msra.mxu0 %v397
  %528 = vmatprep.subr.bf16.mxu0 0
  %529 = vmatpush1.bf16.msra.mxu0 %v398
  %530 = vmatprep.subr.bf16.mxu0 0
  %531 = vmatpush1.bf16.msra.mxu0 %v399
  %532 = vmatprep.subr.bf16.mxu0 0
  %533 = vmatpush1.bf16.msra.mxu0 %v400
  %534 = vmatprep.subr.bf16.mxu0 0
  %535 = vmatpush1.bf16.msra.mxu0 %v401
  %536 = vmatprep.subr.bf16.mxu0 0
  %537 = vmatpush1.bf16.msra.mxu0 %v402
  %538 = vmatprep.subr.bf16.mxu0 0
  %539 = vmatpush1.bf16.msra.mxu0 %v403
  %540 = vmatprep.subr.bf16.mxu0 0
  %541 = vmatpush1.bf16.msra.mxu0 %v404
  %542 = vmatprep.mubr.bf16.mxu0 %v36
  %543 = vmatmul.mubr.bf16.gmra.mrb[0].mxu0 %v35
  %v544 = vpop.f32.mrb[0].mxu0
  %v545 = vadd.f32 %v161, %v544
  %v546 = vpop.f32.mrb[0].mxu0
  %v547 = vpop.f32.mrb[0].mxu0
  %v548 = vpop.f32.mrb[0].mxu0
  %549 = vdwg.mxu0
  %550 = vmatprep.subr.bf16.mxu0 0
  %551 = vmatpush1.bf16.msra.mxu0 %v405
  %552 = vmatprep.subr.bf16.mxu0 0
  %553 = vmatpush1.bf16.msra.mxu0 %v406
  %554 = vmatprep.subr.bf16.mxu0 0
  %555 = vmatpush1.bf16.msra.mxu0 %v407
  %556 = vmatprep.subr.bf16.mxu0 0
  %557 = vmatpush1.bf16.msra.mxu0 %v408
  %558 = vmatprep.subr.bf16.mxu0 0
  %559 = vmatpush1.bf16.msra.mxu0 %v409
  %560 = vmatprep.subr.bf16.mxu0 0
  %561 = vmatpush1.bf16.msra.mxu0 %v410
  %562 = vmatprep.subr.bf16.mxu0 0
  %563 = vmatpush1.bf16.msra.mxu0 %v411
  %564 = vmatprep.subr.bf16.mxu0 0
  %565 = vmatpush1.bf16.msra.mxu0 %v412
  %566 = vmatprep.subr.bf16.mxu0 0
  %567 = vmatpush1.bf16.msra.mxu0 %v413
  %568 = vmatprep.subr.bf16.mxu0 0
  %569 = vmatpush1.bf16.msra.mxu0 %v414
  %570 = vmatprep.subr.bf16.mxu0 0
  %571 = vmatpush1.bf16.msra.mxu0 %v415
  %572 = vmatprep.subr.bf16.mxu0 0
  %573 = vmatpush1.bf16.msra.mxu0 %v416
  %574 = vmatprep.subr.bf16.mxu0 0
  %575 = vmatpush1.bf16.msra.mxu0 %v417
  %576 = vmatprep.subr.bf16.mxu0 0
  %577 = vmatpush1.bf16.msra.mxu0 %v418
  %578 = vmatprep.subr.bf16.mxu0 0
  %579 = vmatpush1.bf16.msra.mxu0 %v419
  %580 = vmatprep.subr.bf16.mxu0 0
  %581 = vmatpush1.bf16.msra.mxu0 %v420
  %582 = vmatprep.mubr.bf16.mxu0 %v38
  %583 = vmatmul.mubr.bf16.gmra.mrb[0].mxu0 %v37
  %v584 = vpop.f32.mrb[0].mxu0
  %v585 = vadd.f32 %v545, %v584
  %v586 = vpop.f32.mrb[0].mxu0
  %v587 = vpop.f32.mrb[0].mxu0
  %v588 = vpop.f32.mrb[0].mxu0
  %589 = vdwg.mxu0
  %590 = vmatprep.subr.bf16.mxu0 0
  %591 = vmatpush1.bf16.msra.mxu0 %v421
  %592 = vmatprep.subr.bf16.mxu0 0
  %593 = vmatpush1.bf16.msra.mxu0 %v422
  %594 = vmatprep.subr.bf16.mxu0 0
  %595 = vmatpush1.bf16.msra.mxu0 %v423
  %596 = vmatprep.subr.bf16.mxu0 0
  %597 = vmatpush1.bf16.msra.mxu0 %v424
  %598 = vmatprep.subr.bf16.mxu0 0
  %599 = vmatpush1.bf16.msra.mxu0 %v425
  %600 = vmatprep.subr.bf16.mxu0 0
  %601 = vmatpush1.bf16.msra.mxu0 %v426
  %602 = vmatprep.subr.bf16.mxu0 0
  %603 = vmatpush1.bf16.msra.mxu0 %v427
  %604 = vmatprep.subr.bf16.mxu0 0
  %605 = vmatpush1.bf16.msra.mxu0 %v428
  %606 = vmatprep.subr.bf16.mxu0 0
  %607 = vmatpush1.bf16.msra.mxu0 %v429
  %608 = vmatprep.subr.bf16.mxu0 0
  %609 = vmatpush1.bf16.msra.mxu0 %v430
  %610 = vmatprep.subr.bf16.mxu0 0
  %611 = vmatpush1.bf16.msra.mxu0 %v431
  %612 = vmatprep.subr.bf16.mxu0 0
  %613 = vmatpush1.bf16.msra.mxu0 %v432
  %614 = vmatprep.subr.bf16.mxu0 0
  %615 = vmatpush1.bf16.msra.mxu0 %v433
  %616 = vmatprep.subr.bf16.mxu0 0
  %617 = vmatpush1.bf16.msra.mxu0 %v434
  %618 = vmatprep.subr.bf16.mxu0 0
  %619 = vmatpush1.bf16.msra.mxu0 %v435
  %620 = vmatprep.subr.bf16.mxu0 0
  %621 = vmatpush1.bf16.msra.mxu0 %v436
  %622 = vmatprep.mubr.bf16.mxu0 %v40
  %623 = vmatmul.mubr.bf16.gmra.mrb[0].mxu0 %v39
  %v624 = vpop.f32.mrb[0].mxu0
  %v625 = vadd.f32 %v585, %v624
  %v626 = vpop.f32.mrb[0].mxu0
  %v627 = vpop.f32.mrb[0].mxu0
  %v628 = vpop.f32.mrb[0].mxu0
  %629 = vdwg.mxu0
  %630 = vmatprep.subr.bf16.mxu0 0
  %631 = vmatpush1.bf16.msra.mxu0 %v437
  %632 = vmatprep.subr.bf16.mxu0 0
  %633 = vmatpush1.bf16.msra.mxu0 %v438
  %634 = vmatprep.subr.bf16.mxu0 0
  %635 = vmatpush1.bf16.msra.mxu0 %v439
  %636 = vmatprep.subr.bf16.mxu0 0
  %637 = vmatpush1.bf16.msra.mxu0 %v440
  %638 = vmatprep.subr.bf16.mxu0 0
  %639 = vmatpush1.bf16.msra.mxu0 %v441
  %640 = vmatprep.subr.bf16.mxu0 0
  %641 = vmatpush1.bf16.msra.mxu0 %v442
  %642 = vmatprep.subr.bf16.mxu0 0
  %643 = vmatpush1.bf16.msra.mxu0 %v443
  %644 = vmatprep.subr.bf16.mxu0 0
  %645 = vmatpush1.bf16.msra.mxu0 %v444
  %646 = vmatprep.subr.bf16.mxu0 0
  %647 = vmatpush1.bf16.msra.mxu0 %v508
  %648 = vmatprep.subr.bf16.mxu0 0
  %649 = vmatpush1.bf16.msra.mxu0 0
  %650 = vmatprep.subr.bf16.mxu0 0
  %651 = vmatpush1.bf16.msra.mxu0 0
  %652 = vmatprep.subr.bf16.mxu0 0
  %653 = vmatpush1.bf16.msra.mxu0 0
  %654 = vmatprep.subr.bf16.mxu0 0
  %655 = vmatpush1.bf16.msra.mxu0 0
  %656 = vmatprep.subr.bf16.mxu0 0
  %657 = vmatpush1.bf16.msra.mxu0 0
  %658 = vmatprep.subr.bf16.mxu0 0
  %659 = vmatpush1.bf16.msra.mxu0 0
  %660 = vmatprep.subr.bf16.mxu0 0
  %661 = vmatpush1.bf16.msra.mxu0 0
  %662 = vmatprep.mubr.bf16.mxu0 %v504
  %663 = vmatmul.mubr.bf16.gmra.mrb[0].mxu0 %v41
  %v664 = vpop.f32.mrb[0].mxu0
  %v665 = vadd.f32 %v625, %v664
  %v666 = vpop.f32.mrb[0].mxu0
  %v667 = vpop.f32.mrb[0].mxu0
  %v668 = vpop.f32.mrb[0].mxu0
  %669 = vdwg.mxu0
  %v670 = vpack.c.bf16 %v665, %v665
  %v671 = vld [vmem:[%s3] sm:$0xff]
  %v672 = vld [vmem:[%s3 + $0x8] sm:$0xff]
  %v673 = vld [vmem:[%s3 + $0x10] sm:$0xff]
  %v674 = vld [vmem:[%s3 + $0x18] sm:$0xff]
  %v675 = vld [vmem:[%s3 + $0x20] sm:$0xff]
  %v676 = vld [vmem:[%s3 + $0x28] sm:$0xff]
  %v677 = vld [vmem:[%s3 + $0x30] sm:$0xff]
  %v678 = vld [vmem:[%s3 + $0x38] sm:$0xff]
  %v679 = vld [vmem:[%s4] sm:$0x3]
  %v681 = vlaneseq
  %v682 = vshrl.u32 %v681, 7
  %v683 = vsub.s32 0, %v682
  %v684 = vrot.slane %v679, %v683
  %v685 = vlaneseq
  %v686 = vshrl.u32 %v685, 7
  %v687 = vsub.s32 1, %v686
  %v688 = vrot.slane %v679, %v687
  %v699 = vunpack.c.l.b16 %v671
  %v700 = vunpack.c.h.b16 %v671
  %v701 = vunpack.c.l.b16 %v672
  %v702 = vunpack.c.h.b16 %v672
  %v703 = vunpack.c.l.b16 %v673
  %v704 = vunpack.c.h.b16 %v673
  %v705 = vunpack.c.l.b16 %v674
  %v706 = vunpack.c.h.b16 %v674
  %v707 = vunpack.c.l.b16 %v675
  %v708 = vunpack.c.h.b16 %v675
  %v709 = vunpack.c.l.b16 %v676
  %v710 = vunpack.c.h.b16 %v676
  %v711 = vunpack.c.l.b16 %v677
  %v712 = vunpack.c.h.b16 %v677
  %v713 = vunpack.c.l.b16 %v678
  %v714 = vunpack.c.h.b16 %v678
  %v715 = vpack.c.b16 %v701, %v699
  %v716 = vpack.c.b16 %v702, %v700
  %v717 = vpack.c.b16 %v705, %v703
  %v718 = vpack.c.b16 %v706, %v704
  %v719 = vpack.c.b16 %v709, %v707
  %v720 = vpack.c.b16 %v710, %v708
  %v721 = vpack.c.b16 %v713, %v711
  %v722 = vpack.c.b16 %v714, %v712
  %vm731 = vcmask 523264
  %v733 = vsel %vm731, %v670, 0
  %735 = vmatprep.subr.bf16.mxu0 %v716
  %736 = vmatpush1.bf16.msra.mxu0 %v715
  %737 = vmatprep.subr.bf16.mxu0 %v718
  %738 = vmatpush1.bf16.msra.mxu0 %v717
  %739 = vmatprep.subr.bf16.mxu0 %v720
  %740 = vmatpush1.bf16.msra.mxu0 %v719
  %741 = vmatprep.subr.bf16.mxu0 %v722
  %742 = vmatpush1.bf16.msra.mxu0 %v721
  %743 = vmatprep.subr.bf16.mxu0 0
  %744 = vmatpush1.bf16.msra.mxu0 0
  %745 = vmatprep.subr.bf16.mxu0 0
  %746 = vmatpush1.bf16.msra.mxu0 0
  %747 = vmatprep.subr.bf16.mxu0 0
  %748 = vmatpush1.bf16.msra.mxu0 0
  %749 = vmatprep.subr.bf16.mxu0 0
  %750 = vmatpush1.bf16.msra.mxu0 0
  %751 = vmatprep.subr.bf16.mxu0 0
  %752 = vmatpush1.bf16.msra.mxu0 0
  %753 = vmatprep.subr.bf16.mxu0 0
  %754 = vmatpush1.bf16.msra.mxu0 0
  %755 = vmatprep.subr.bf16.mxu0 0
  %756 = vmatpush1.bf16.msra.mxu0 0
  %757 = vmatprep.subr.bf16.mxu0 0
  %758 = vmatpush1.bf16.msra.mxu0 0
  %759 = vmatprep.subr.bf16.mxu0 0
  %760 = vmatpush1.bf16.msra.mxu0 0
  %761 = vmatprep.subr.bf16.mxu0 0
  %762 = vmatpush1.bf16.msra.mxu0 0
  %763 = vmatprep.subr.bf16.mxu0 0
  %764 = vmatpush1.bf16.msra.mxu0 0
  %765 = vmatprep.subr.bf16.mxu0 0
  %766 = vmatpush1.bf16.msra.mxu0 0
  %767 = vmatprep.mubr.bf16.mxu0 0
  %768 = vmatmul.mubr.bf16.gmra.mrb[0].mxu0 %v733
  %v769 = vpop.f32.mrb[0].mxu0
  %v770 = vadd.f32 %v684, %v769
  %v771 = vpop.f32.mrb[0].mxu0
  %v772 = vadd.f32 %v688, %v771
  %v773 = vpop.f32.mrb[0].mxu0
  %v774 = vpop.f32.mrb[0].mxu0
  %775 = vdwg.mxu0
  %v776 = vmax.f32 %v770, 0.0
  %v777 = vmax.f32 %v772, 0.0
  %v778 = vpack.c.bf16 %v776, %v776
  %v779 = vpack.c.bf16 %v777, %v777
  %v780 = vld [vmem:[%s5] sm:$0xf]
  %v781 = vld [vmem:[%s5 + $0x4] sm:$0xf]
  %v782 = vld [vmem:[%s5 + $0x8] sm:$0xf]
  %v783 = vld [vmem:[%s5 + $0xc] sm:$0xf]
  %v784 = vld [vmem:[%s5 + $0x10] sm:$0xf]
  %v785 = vld [vmem:[%s5 + $0x14] sm:$0xf]
  %v786 = vld [vmem:[%s5 + $0x18] sm:$0xf]
  %v787 = vld [vmem:[%s5 + $0x1c] sm:$0xf]
  %v788 = vld [vmem:[%s5 + $0x20] sm:$0xf]
  %v789 = vld [vmem:[%s5 + $0x24] sm:$0xf]
  %v790 = vld [vmem:[%s5 + $0x28] sm:$0xf]
  %v791 = vld [vmem:[%s5 + $0x2c] sm:$0xf]
  %v792 = vld [vmem:[%s5 + $0x30] sm:$0xf]
  %v793 = vld [vmem:[%s5 + $0x34] sm:$0xf]
  %v794 = vld [vmem:[%s5 + $0x38] sm:$0xf]
  %v795 = vld [vmem:[%s5 + $0x3c] sm:$0xf]
  %v796 = vld [vmem:[%s5 + $0x40] sm:$0xf]
  %v797 = vld [vmem:[%s5 + $0x44] sm:$0xf]
  %v798 = vld [vmem:[%s5 + $0x48] sm:$0xf]
  %v799 = vld [vmem:[%s5 + $0x4c] sm:$0xf]
  %v800 = vld [vmem:[%s5 + $0x50] sm:$0xf]
  %v801 = vld [vmem:[%s5 + $0x54] sm:$0xf]
  %v802 = vld [vmem:[%s5 + $0x58] sm:$0xf]
  %v803 = vld [vmem:[%s5 + $0x5c] sm:$0xf]
  %v804 = vld [vmem:[%s5 + $0x60] sm:$0xf]
  %v805 = vld [vmem:[%s5 + $0x64] sm:$0xf]
  %v806 = vld [vmem:[%s5 + $0x68] sm:$0xf]
  %v807 = vld [vmem:[%s5 + $0x6c] sm:$0xf]
  %v808 = vld [vmem:[%s5 + $0x70] sm:$0xf]
  %v809 = vld [vmem:[%s5 + $0x74] sm:$0xf]
  %v810 = vld [vmem:[%s5 + $0x78] sm:$0xf]
  %v811 = vld [vmem:[%s5 + $0x7c] sm:$0xf]
  %v812 = vld [vmem:[%s6] sm:$0x1]
  %v814 = vlaneseq
  %v815 = vshrl.u32 %v814, 7
  %v816 = vsub.s32 0, %v815
  %v817 = vrot.slane %v812, %v816
  %v851 = vunpack.c.l.b16 %v780
  %v852 = vunpack.c.l.b16 %v781
  %v853 = vunpack.c.l.b16 %v782
  %v854 = vunpack.c.l.b16 %v783
  %v855 = vunpack.c.l.b16 %v784
  %v856 = vunpack.c.l.b16 %v785
  %v857 = vunpack.c.l.b16 %v786
  %v858 = vunpack.c.l.b16 %v787
  %v859 = vunpack.c.l.b16 %v788
  %v860 = vunpack.c.l.b16 %v789
  %v861 = vunpack.c.l.b16 %v790
  %v862 = vunpack.c.l.b16 %v791
  %v863 = vunpack.c.l.b16 %v792
  %v864 = vunpack.c.l.b16 %v793
  %v865 = vunpack.c.l.b16 %v794
  %v866 = vunpack.c.l.b16 %v795
  %v867 = vunpack.c.l.b16 %v796
  %v868 = vunpack.c.l.b16 %v797
  %v869 = vunpack.c.l.b16 %v798
  %v870 = vunpack.c.l.b16 %v799
  %v871 = vunpack.c.l.b16 %v800
  %v872 = vunpack.c.l.b16 %v801
  %v873 = vunpack.c.l.b16 %v802
  %v874 = vunpack.c.l.b16 %v803
  %v875 = vunpack.c.l.b16 %v804
  %v876 = vunpack.c.l.b16 %v805
  %v877 = vunpack.c.l.b16 %v806
  %v878 = vunpack.c.l.b16 %v807
  %v879 = vunpack.c.l.b16 %v808
  %v880 = vunpack.c.l.b16 %v809
  %v881 = vunpack.c.l.b16 %v810
  %v882 = vunpack.c.l.b16 %v811
  %v883 = vpack.c.b16 %v852, %v851
  %v884 = vpack.c.b16 %v854, %v853
  %v885 = vpack.c.b16 %v856, %v855
  %v886 = vpack.c.b16 %v858, %v857
  %v887 = vpack.c.b16 %v860, %v859
  %v888 = vpack.c.b16 %v862, %v861
  %v889 = vpack.c.b16 %v864, %v863
  %v890 = vpack.c.b16 %v866, %v865
  %v891 = vpack.c.b16 %v868, %v867
  %v892 = vpack.c.b16 %v870, %v869
  %v893 = vpack.c.b16 %v872, %v871
  %v894 = vpack.c.b16 %v874, %v873
  %v895 = vpack.c.b16 %v876, %v875
  %v896 = vpack.c.b16 %v878, %v877
  %v897 = vpack.c.b16 %v880, %v879
  %v898 = vpack.c.b16 %v882, %v881
  %915 = vmatprep.subr.bf16.mxu0 0
  %916 = vmatpush1.bf16.msra.mxu0 %v883
  %917 = vmatprep.subr.bf16.mxu0 0
  %918 = vmatpush1.bf16.msra.mxu0 %v884
  %919 = vmatprep.subr.bf16.mxu0 0
  %920 = vmatpush1.bf16.msra.mxu0 %v885
  %921 = vmatprep.subr.bf16.mxu0 0
  %922 = vmatpush1.bf16.msra.mxu0 %v886
  %923 = vmatprep.subr.bf16.mxu0 0
  %924 = vmatpush1.bf16.msra.mxu0 %v887
  %925 = vmatprep.subr.bf16.mxu0 0
  %926 = vmatpush1.bf16.msra.mxu0 %v888
  %927 = vmatprep.subr.bf16.mxu0 0
  %928 = vmatpush1.bf16.msra.mxu0 %v889
  %929 = vmatprep.subr.bf16.mxu0 0
  %930 = vmatpush1.bf16.msra.mxu0 %v890
  %931 = vmatprep.subr.bf16.mxu0 0
  %932 = vmatpush1.bf16.msra.mxu0 %v891
  %933 = vmatprep.subr.bf16.mxu0 0
  %934 = vmatpush1.bf16.msra.mxu0 %v892
  %935 = vmatprep.subr.bf16.mxu0 0
  %936 = vmatpush1.bf16.msra.mxu0 %v893
  %937 = vmatprep.subr.bf16.mxu0 0
  %938 = vmatpush1.bf16.msra.mxu0 %v894
  %939 = vmatprep.subr.bf16.mxu0 0
  %940 = vmatpush1.bf16.msra.mxu0 %v895
  %941 = vmatprep.subr.bf16.mxu0 0
  %942 = vmatpush1.bf16.msra.mxu0 %v896
  %943 = vmatprep.subr.bf16.mxu0 0
  %944 = vmatpush1.bf16.msra.mxu0 %v897
  %945 = vmatprep.subr.bf16.mxu0 0
  %946 = vmatpush1.bf16.msra.mxu0 %v898
  %947 = vmatprep.mubr.bf16.mxu0 %v779
  %948 = vmatmul.mubr.bf16.gmra.mrb[0].mxu0 %v778
  %v949 = vpop.f32.mrb[0].mxu0
  %v950 = vadd.f32 %v817, %v949
  %v951 = vpop.f32.mrb[0].mxu0
  %v952 = vpop.f32.mrb[0].mxu0
  %v953 = vpop.f32.mrb[0].mxu0
  %954 = vdwg.mxu0
  %v955 = vpack.c.bf16 %v950, %v950
  %956 = vst [vmem:[%s7] sm:$0xf] %v955
  // Predicated region
  $region30: #{imu_mlp_forward.1} parent=0 // pred_check
    _
  $region31: #{imu_mlp_forward.1} parent=0 // pred_check_branch
    %958 = sbr.rel (0) target = $region33
  $region32: #{imu_mlp_forward.1} parent=0 // pred_region
    _
  $region33: #{imu_mlp_forward.1} parent=0 // pred_fallthru
    _
  // Predicated region
  $region34: #{imu_mlp_forward.1} parent=0 // pred_check
    _
  $region35: #{imu_mlp_forward.1} parent=0 // pred_check_branch
    %960 = sbr.rel (0) target = $region37
  $region36: #{imu_mlp_forward.1} parent=0 // pred_region
    _
  $region37: #{imu_mlp_forward.1} parent=0 // pred_fallthru
    _

</llo_original>
